<compile_context>
chip_gen: v5e
topology: v5e:2x2
jax: 0.10.0
libtpu: 0.0.40
codegen_flags: <defaults>
</compile_context>

<pallas_src>
import math

import jax
import jax.numpy as jnp
from jax.experimental import pallas as pl
from jax.experimental.pallas import tpu as pltpu


# ----------------------------------------------------------------------------
# Parameter preprocessing (plain JAX, run ONCE, off the per-call hot path)
# ----------------------------------------------------------------------------
def trans_to_cir(weight, block_size):
    """JAX port of CirMatrix.trans_to_cir. weight: (out_features, in_features)."""
    out_features, in_features = weight.shape
    b = block_size
    assert out_features % b == 0 and in_features % b == 0
    q = out_features // b
    p = in_features // b

    # (q, b, p, b) -> (q, p, b, b)
    tmp = weight.reshape(q, b, p, b).transpose(0, 2, 1, 3)

    # tmp_compress[:, :, i] = mean of wrapped diagonal with offset i
    cols = []
    for i in range(b):
        diag = jnp.diagonal(tmp, offset=i, axis1=2, axis2=3)                    # (q, p, b-i)
        if i > 0:
            part_two = jnp.diagonal(tmp, offset=-(b - i), axis1=2, axis2=3)     # (q, p, i)
            diag = jnp.concatenate([diag, part_two], axis=2)                    # (q, p, b)
        cols.append(diag.mean(axis=2))                                          # (q, p)
    tmp_compress = jnp.stack(cols, axis=2)                                      # (q, p, b)

    # w[:, :, :, i] = roll(tmp_compress, shift=i, axis=2)
    w = jnp.stack([jnp.roll(tmp_compress, shift=i, axis=2) for i in range(b)],
                  axis=3)                                                       # (q, p, b, b)

    # (q, p, b, b) -> (q, b, p, b) -> (out, in)
    return w.transpose(0, 2, 1, 3).reshape(out_features, in_features)


def prepare_cir_weight(weight, *, cir, block_size, compute_dtype=jnp.bfloat16):
    """Precompute the (K, N) operand consumed by the kernel.

    Hoists trans_to_cir, the transpose AND the (default bf16) cast out of the
    per-forward-call path so they cost zero on the hot path.  bf16 is the
    default: the circulant compression is already lossy, and bf16 halves
    weight HBM traffic while hitting the native MXU rate.  Pass
    compute_dtype=jnp.float32 for a bit-faithful f32 path.
    """
    if cir:
        weight = trans_to_cir(weight, block_size)
    wt = weight.T                                   # (in_features, out_features) = (K, N)
    if compute_dtype is not None:
        wt = wt.astype(compute_dtype)
    return wt


# ----------------------------------------------------------------------------
# Pallas kernels
# ----------------------------------------------------------------------------
def _matmul_kernel_single_k(x_ref, wt_ref, o_ref):
    # Whole K in one block: no accumulator, no pl.when, pure MXU streaming.
    o_ref[...] = jnp.dot(
        x_ref[...].astype(wt_ref.dtype), wt_ref[...],
        preferred_element_type=jnp.float32).astype(o_ref.dtype)


def _matmul_kernel_multi_k(x_ref, wt_ref, o_ref, acc_ref):
    # x_ref: (tm, tk)  wt_ref: (tk, tn)  o_ref: (tm, tn)  acc_ref: (tm, tn) f32
    k = pl.program_id(2)
    partial = jnp.dot(x_ref[...].astype(wt_ref.dtype), wt_ref[...],
                      preferred_element_type=jnp.float32)

    @pl.when(k == 0)
    def _():
        acc_ref[...] = partial          # folded init (no zeros store + RMW)

    @pl.when(k > 0)
    def _():
        acc_ref[...] += partial

    @pl.when(k == pl.num_programs(2) - 1)
    def _():
        o_ref[...] = acc_ref[...].astype(o_ref.dtype)


# ----------------------------------------------------------------------------
# Tiling helpers
# ----------------------------------------------------------------------------
def _round_up(x, m):
    return ((x + m - 1) // m) * m


def _cdiv(a, b):
    return (a + b - 1) // b


def _largest_divisor_tile(dim, target):
    """Largest lane-aligned tile <= target that divides dim.

    Prefers 256-multiples (2x256x256 MXUs on v6e/v7x), falls back to
    128-multiples (v5e), else the full dimension.
    """
    for gran in (256, 128):
        t = (min(target, dim) // gran) * gran
        while t >= gran:
            if dim % t == 0:
                return t
            t -= gran
    return dim


def _vmem_budget_bytes():
    """Generation-aware VMEM budget (~80% of capacity)."""
    try:
        cap = int(pltpu.get_tpu_info().vmem_capacity_bytes)
    except Exception:
        cap = 64 * 2**20            # conservative fallback (safe on v7x too)
    return int(cap * 0.80)


# ----------------------------------------------------------------------------
# Forward wrapper
# ----------------------------------------------------------------------------
def cir_matrix_forward(x, wt_kn, *, out_dtype=None,
                       tm_target=512, tn_target=1024, tk_target=2048):
    """x: (..., K) ; wt_kn: (K, N) precomputed via prepare_cir_weight."""
    out_dtype = jnp.dtype(out_dtype if out_dtype is not None else x.dtype)
    lead_shape = x.shape[:-1]
    K = x.shape[-1]
    Kw, N = wt_kn.shape
    assert Kw == K, "weight/input feature mismatch"

    x2 = x.reshape(-1, K)
    M = x2.shape[0]

    x_bytes = jnp.dtype(x2.dtype).itemsize
    w_bytes = jnp.dtype(wt_kn.dtype).itemsize
    o_bytes = out_dtype.itemsize

    # Sublane granularity for the x / out row dimension.
    sub = 8 if x_bytes >= 4 else (16 if x_bytes == 2 else 32)

    # ---- row tile (cdiv grid: tm need not divide M, no wrapper padding) ----
    tm = min(tm_target, _round_up(M, sub))

    # ---- lane-dense N tile (cdiv grid + masked boundary writes) ------------
    if N < 128:
        tn = N                                      # full dim is the only legal block
    else:
        tn = min((tn_target // 128) * 128, _round_up(N, 128))

    # ---- K tile: must cover K exactly (reduction axis, no overhang) --------
    if K % 128 != 0 or K <= tk_target:
        tk = K                                      # single K block whenever feasible
    else:
        tk = _largest_divisor_tile(K, tk_target)

    # ---- keep >=2 blocks on a parallel axis (v7x has 2 TensorCores) --------
    if _cdiv(M, tm) == 1 and _cdiv(N, tn) == 1 and N >= 256:
        tn = max(128, _round_up(_cdiv(N, 2), 128))

    # ---- shrink tiles until the double-buffered working set fits VMEM ------
    budget = _vmem_budget_bytes()

    def est(tm_, tn_, tk_):
        acc = tm_ * tn_ * 4 if _cdiv(K, tk_) > 1 else 0
        return 2 * (tm_ * tk_ * x_bytes + tk_ * tn_ * w_bytes
                    + tm_ * tn_ * o_bytes) + acc

    for _ in range(64):
        if est(tm, tn, tk) <= budget:
            break
        if tn > 128:
            tn = max(128, _round_up(tn // 2, 128))
        elif tm > sub:
            tm = max(sub, _round_up(tm // 2, sub))
        elif tk > 128 and K % 128 == 0:
            tk = _largest_divisor_tile(K, max(128, tk // 2))
        else:
            break

    mg, ng, kg = _cdiv(M, tm), _cdiv(N, tn), _cdiv(K, tk)

    cost = pl.CostEstimate(
        flops=2 * M * K * N,
        transcendentals=0,
        bytes_accessed=(M * K * x_bytes + K * N * w_bytes + M * N * o_bytes))

    if kg == 1:
        compiler_params = pltpu.CompilerParams(
            dimension_semantics=("parallel", "parallel"),
            vmem_limit_bytes=budget)
        out = pl.pallas_call(
            _matmul_kernel_single_k,
            out_shape=jax.ShapeDtypeStruct((M, N), out_dtype),
            grid_spec=pltpu.PrefetchScalarGridSpec(
                num_scalar_prefetch=0,
                grid=(mg, ng),
                in_specs=[
                    pl.BlockSpec((tm, K), lambda i, j: (i, 0)),    # x row tile
                    pl.BlockSpec((K, tn), lambda i, j: (0, j)),    # weight (K, N) tile
                ],
                out_specs=pl.BlockSpec((tm, tn), lambda i, j: (i, j))),
            compiler_params=compiler_params,
            cost_estimate=cost,
        )(x2, wt_kn)
    else:
        compiler_params = pltpu.CompilerParams(
            dimension_semantics=("parallel", "parallel", "arbitrary"),
            vmem_limit_bytes=budget)
        out = pl.pallas_call(
            _matmul_kernel_multi_k,
            out_shape=jax.ShapeDtypeStruct((M, N), out_dtype),
            grid_spec=pltpu.PrefetchScalarGridSpec(
                num_scalar_prefetch=0,
                grid=(mg, ng, kg),
                in_specs=[
                    pl.BlockSpec((tm, tk), lambda i, j, k: (i, k)),
                    pl.BlockSpec((tk, tn), lambda i, j, k: (k, j)),
                ],
                out_specs=pl.BlockSpec((tm, tn), lambda i, j, k: (i, j)),
                scratch_shapes=[pltpu.VMEM((tm, tn), jnp.float32)]),
            compiler_params=compiler_params,
            cost_estimate=cost,
        )(x2, wt_kn)

    return out.reshape(*lead_shape, N)


# ----------------------------------------------------------------------------
# Deterministic parameter init (mirrors nn.init.kaiming_uniform_ defaults)
# ----------------------------------------------------------------------------
def init_cir_matrix_weight(key, out_features, in_features, dtype=jnp.float32):
    # kaiming_uniform_(a=0, mode='fan_in', nonlinearity='leaky_relu'):
    # gain = sqrt(2), bound = gain * sqrt(3 / fan_in)
    bound = math.sqrt(2.0) * math.sqrt(3.0 / in_features)
    return jax.random.uniform(key, (out_features, in_features),
                              dtype=dtype, minval=-bound, maxval=bound)


if __name__ == "__main__":
    # Small config consistent with the module.
    in_features = 32        # hidden size K
    out_features = 64       # output features N
    block_size = 2
    cir = True

    key = jax.random.PRNGKey(0)
    k_w, k_x = jax.random.split(key)

    weight = init_cir_matrix_weight(k_w, out_features, in_features)
    # NOTE: bias exists in CirMatrix.__init__ (zeros) but is never used in forward.

    batch, seq = 2, 8
    x = jax.random.normal(k_x, (batch, seq, in_features), dtype=jnp.float32)

    # Reference (plain JAX).
    w_ref = trans_to_cir(weight, block_size)
    ref = x @ w_ref.T

    # --- f32 path (exact tolerance) -----------------------------------------
    wt_f32 = prepare_cir_weight(weight, cir=cir, block_size=block_size,
                                compute_dtype=jnp.float32)
    out = cir_matrix_forward(x, wt_f32)
    jax.block_until_ready(out)
    assert out.shape == (batch, seq, out_features)
    assert jnp.allclose(out, ref, atol=1e-4), "f32 mismatch vs reference"

    # --- bf16 default compute path (f32 accumulation), loose tolerance ------
    wt_bf16 = prepare_cir_weight(weight, cir=cir, block_size=block_size)
    out_bf16 = cir_matrix_forward(x, wt_bf16, out_dtype=jnp.float32)
    jax.block_until_ready(out_bf16)
    assert jnp.allclose(out_bf16, ref, rtol=1e-1, atol=1e-1), "bf16 mismatch vs reference"

    # --- cir=False path ------------------------------------------------------
    wt_plain = prepare_cir_weight(weight, cir=False, block_size=block_size,
                                  compute_dtype=jnp.float32)
    out_plain = cir_matrix_forward(x, wt_plain)
    jax.block_until_ready(out_plain)
    assert jnp.allclose(out_plain, x @ weight.T, atol=1e-4), "non-cir mismatch"

    print("KERNEL_OK")
</pallas_src>

<mosaic_0001>
module attributes {stable_mosaic.version = 11 : i64} {
  func.func @_matmul_kernel_single_k(%arg0: i32, %arg1: i32, %arg2: memref<16x32xf32, #tpu.memory_space<vmem>>, %arg3: memref<32x64xf32, #tpu.memory_space<vmem>>, %arg4: memref<16x64xf32, #tpu.memory_space<vmem>>) attributes {dimension_semantics = [#tpu.dimension_semantics<parallel>, #tpu.dimension_semantics<parallel>], iteration_bounds = array<i64: 1, 1>, scalar_prefetch = 0 : i64, scratch_operands = 0 : i64, tpu.core_type = #tpu.core_type<tc>, window_params = [{transform_indices = @transform_0, window_bounds = array<i64: 16, 32>}, {transform_indices = @transform_1, window_bounds = array<i64: 32, 64>}, {transform_indices = @transform_2, window_bounds = array<i64: 16, 64>}]} {
    %c0 = arith.constant 0 : index
    %c0_0 = arith.constant 0 : index
    %0 = vector.load %arg2[%c0, %c0_0] : memref<16x32xf32, #tpu.memory_space<vmem>>, vector<16x32xf32>
    %c0_1 = arith.constant 0 : index
    %c0_2 = arith.constant 0 : index
    %1 = vector.load %arg3[%c0_1, %c0_2] : memref<32x64xf32, #tpu.memory_space<vmem>>, vector<32x64xf32>
    %cst = arith.constant dense<0.000000e+00> : vector<16x64xf32>
    %2 = tpu.matmul %0, %1, %cst {dimension_numbers = #tpu.dot_dimension_numbers<[1], [0], [0], [1], [0, 0, 1, 1], [], []>} : vector<16x32xf32>, vector<32x64xf32>, vector<16x64xf32> -> vector<16x64xf32>
    %c0_3 = arith.constant 0 : index
    %c0_4 = arith.constant 0 : index
    %3 = vector.load %arg4[%c0_3, %c0_4] : memref<16x64xf32, #tpu.memory_space<vmem>>, vector<16x64xf32>
    tpu.vector_store %arg4[%c0_3, %c0_4], %2 {strides = array<i32>} : memref<16x64xf32, #tpu.memory_space<vmem>>, vector<16x64xf32>,
    return
  }
  func.func @transform_0(%arg0: i32, %arg1: i32) -> (i32, i32) {
    %c0_i32 = arith.constant 0 : i32
    %c0_i32_0 = arith.constant 0 : i32
    return %arg0, %c0_i32 : i32, i32
  }
  func.func @transform_1(%arg0: i32, %arg1: i32) -> (i32, i32) {
    %c0_i32 = arith.constant 0 : i32
    %c0_i32_0 = arith.constant 0 : i32
    return %c0_i32, %arg1 : i32, i32
  }
  func.func @transform_2(%arg0: i32, %arg1: i32) -> (i32, i32) {
    %c0_i32 = arith.constant 0 : i32
    return %arg0, %arg1 : i32, i32
  }
}

</mosaic_0001>

<llo_original>
// kernel: tpu_custom_call.1
$region0: #{tpu_custom_call.1}
  #allocation0 [shape = 'u32[]', space=smem, size = 0x4, offset = 0x4, fixed_abs, tag = 'smem constant byte address 0x4 - core index']
  #allocation1 [shape = 'u32[72,128]{1,0:T(1,128)}', space=vmem, size = 0x9000, scoped, tag = 'internal scratch']
  %s0 = inlined_call_operand.hbm [shape: f32[16,32], index: 0, kind: input, shape index: {}]
  %s1 = inlined_call_operand.hbm [shape: f32[32,64], index: 1, kind: input, shape index: {}]
  %s2 = inlined_call_operand.hbm [shape: f32[16,64], index: 2, kind: output, shape index: {}]
  %s3 = sld [smem:[#allocation0]]
  $region26: #{tpu_custom_call.1} parent=0
    _
  %s5 = ssub.s32 1, %s3
  %s6 = scalar_select 0, %s5, %s3
  $region1: #{tpu_custom_call.1} parent=0
    #allocation2 [shape = 'u8[8192]{0}', space=vmem, size = 0x2000, scoped, tag = 'input window, operand 0, single buffered']
    #allocation3 [shape = 's32[1]{0}', space=sflag, size = 0x4, scoped, tag = 'scoped memory for tpu_custom_call.1']
    #allocation4 [shape = 's32[1]{0}', space=sflag, size = 0x4, scoped, tag = 'scoped memory for tpu_custom_call.1']
    #allocation5 [shape = 'u8[16384]{0}', space=vmem, size = 0x4000, scoped, tag = 'input window, operand 1, single buffered']
    #allocation6 [shape = 's32[1]{0}', space=sflag, size = 0x4, scoped, tag = 'scoped memory for tpu_custom_call.1']
    #allocation7 [shape = 'u8[8192]{0}', space=vmem, size = 0x2000, scoped, tag = 'output window, operand 0, single buffered']
    %7 = vsyncpa [#allocation3], 0
    %8 = vsyncpa [#allocation6], 0
    %9 = vsyncpa [#allocation4], 0
    // Predicated region
    $region2: #{tpu_custom_call.1} parent=1 // pred_check
      _
    $region3: #{tpu_custom_call.1} parent=1 // pred_check_branch
      %11 = sbr.rel (0) target = $region5
    $region4: #{tpu_custom_call.1} parent=1 // pred_region
      %13 = vsyncadd [#allocation3], 0
      %s14 = sshll.u32 %s0, 4
      %s15 = int_to_ptr.hbm [resolvable:$true] %s14
      %s16 = sshll.u32 [#allocation2], 4
      %s17 = int_to_ptr.vmem [resolvable:$true] %s16
      %22 = dma.hbm_to_vmem [thread:$0]  %s15, 256, %s17, [#allocation3], 128, 128, 8
    $region5: #{tpu_custom_call.1} parent=1 // pred_fallthru
      _
    // Predicated region
    $region6: #{tpu_custom_call.1} parent=1 // pred_check
      _
    $region7: #{tpu_custom_call.1} parent=1 // pred_check_branch
      %24 = sbr.rel (0) target = $region9
    $region8: #{tpu_custom_call.1} parent=1 // pred_region
      %26 = vsyncadd [#allocation6], 0
      %s27 = sshll.u32 %s1, 4
      %s28 = int_to_ptr.hbm [resolvable:$true] %s27
      %s29 = sshll.u32 [#allocation5], 4
      %s30 = int_to_ptr.vmem [resolvable:$true] %s29
      %35 = dma.hbm_to_vmem [thread:$0]  %s28, 512, %s30, [#allocation6], 128, 128, 8
    $region9: #{tpu_custom_call.1} parent=1 // pred_fallthru
      _
    // Predicated region
    $region10: #{tpu_custom_call.1} parent=1 // pred_check
      _
    $region11: #{tpu_custom_call.1} parent=1 // pred_check_branch
      %37 = sbr.rel (0) target = $region13
    $region12: #{tpu_custom_call.1} parent=1 // pred_region
      %39 = dma.done [#allocation3], 256
    $region13: #{tpu_custom_call.1} parent=1 // pred_fallthru
      _
    // Predicated region
    $region14: #{tpu_custom_call.1} parent=1 // pred_check
      _
    $region15: #{tpu_custom_call.1} parent=1 // pred_check_branch
      %41 = sbr.rel (0) target = $region17
    $region16: #{tpu_custom_call.1} parent=1 // pred_region
      %43 = dma.done [#allocation6], 512
    $region17: #{tpu_custom_call.1} parent=1 // pred_fallthru
      _
    %v44 = vld [vmem:[#allocation2] sm:$0xff]
    %v45 = vld [vmem:[#allocation2 + $0x8] sm:$0xff]
    %v46 = vld [vmem:[#allocation5] sm:$0xff]
    %v47 = vld [vmem:[#allocation5 + $0x8] sm:$0xff]
    %v48 = vld [vmem:[#allocation5 + $0x10] sm:$0xff]
    %v49 = vld [vmem:[#allocation5 + $0x18] sm:$0xff]
    %vm50 = vcmask 261120
    %v52 = vsel %vm50, %v44, 0
    %v55 = vsel %vm50, %v45, 0
    %57 = vmatpush.msra.mxu0 0.0
    %58 = vmatpush.msra.mxu0 0.0
    %59 = vmatpush.msra.mxu0 0.0
    %60 = vmatpush.msra.mxu0 0.0
    %61 = vmatpush.msra.mxu0 0.0
    %62 = vmatpush.msra.mxu0 0.0
    %63 = vmatpush.msra.mxu0 0.0
    %64 = vmatpush.msra.mxu0 0.0
    %65 = vmatpush.msra.mxu0 0.0
    %66 = vmatpush.msra.mxu0 0.0
    %67 = vmatpush.msra.mxu0 0.0
    %68 = vmatpush.msra.mxu0 0.0
    %69 = vmatpush.msra.mxu0 %v49
    %70 = vmatpush.msra.mxu0 %v48
    %71 = vmatpush.msra.mxu0 %v47
    %72 = vmatpush.msra.mxu0 %v46
    %73 = vmatmul.f32.gmra.mxu0 %v52
    %v74 = vpop.f32.mrf.mxu0
    %v75 = vadd.f32 0.0, %v74
    %76 = vmatmul.f32.gmra.mxu0 %v55
    %v77 = vpop.f32.mrf.mxu0
    %v78 = vadd.f32 0.0, %v77
    %79 = vdwg.mxu0
    %vm80 = vcmask 523264
    %81 = vst.msk [vmem:[#allocation7] sm:$0xff] %vm80, %v75
    %82 = vst.msk [vmem:[#allocation7 + $0x8] sm:$0xff] %vm80, %v78
    // Predicated region
    $region18: #{tpu_custom_call.1} parent=1 // pred_check
      _
    $region19: #{tpu_custom_call.1} parent=1 // pred_check_branch
      %84 = sbr.rel (0) target = $region21
    $region20: #{tpu_custom_call.1} parent=1 // pred_region
      %86 = vsyncadd [#allocation4], 0
      %s87 = sshll.u32 [#allocation7], 4
      %s88 = int_to_ptr.vmem [resolvable:$true] %s87
      %s89 = sshll.u32 %s2, 4
      %s90 = int_to_ptr.hbm [resolvable:$true] %s89
      %95 = dma.vmem_to_hbm [thread:$0]  %s88, 256, %s90, [#allocation4], 128, 128, 8
    $region21: #{tpu_custom_call.1} parent=1 // pred_fallthru
      _
    // Predicated region
    $region22: #{tpu_custom_call.1} parent=1 // pred_check
      _
    $region23: #{tpu_custom_call.1} parent=1 // pred_check_branch
      %97 = sbr.rel (0) target = $region25
    $region24: #{tpu_custom_call.1} parent=1 // pred_region
      %99 = dma.done [#allocation4], 256
    $region25: #{tpu_custom_call.1} parent=1 // pred_fallthru
      _
    %100 = vsyncpa [#allocation3], 1
    %101 = vsyncpa [#allocation6], 1
    %102 = vsyncpa [#allocation4], 1

</llo_original>
